<compile_context>
chip_gen: v6e
topology: v6e:2x2x1
jax: 0.10.0
libtpu: 0.0.40
codegen_flags: <defaults>
</compile_context>

<pallas_src>
import functools

import jax
import jax.numpy as jnp
from jax.experimental import pallas as pl
from jax.experimental.pallas import tpu as pltpu

_LANE = 512  # default lane-dense working width (multiple of 128)


def _log_sigmoid(x):
    # numerically stable: logsigmoid(x) = min(x, 0) - log1p(exp(-|x|))
    return jnp.minimum(x, 0.0) - jnp.log1p(jnp.exp(-jnp.abs(x)))


def _tile_partial_sum(v):
    """(tn, L) -> (8, L): sum aligned 8-row bands (pure vreg VALU adds)."""
    tn, L = v.shape
    return jnp.sum(v.reshape(tn // 8, 8, L), axis=0)


def _focal_kernel(x_ref, t_ref, out_ref, *, gamma, alpha, binary_targets,
                  total, block_elems, lane, has_tail):
    i = pl.program_id(0)

    x = x_ref[...].astype(jnp.float32)          # (tn, lane)
    t = t_ref[...].astype(jnp.float32)          # (tn, lane)

    lsx = _log_sigmoid(x)                       # 2 EUP ops / element
    xt = x * t
    loss = x - xt - lsx
    if binary_targets:
        # exact for t in {0, 1}: logsigmoid(-x*(2t-1)) == logsigmoid(x) - x*t
        invprobs = lsx - xt
    else:
        invprobs = _log_sigmoid(-x * (t * 2.0 - 1.0))
    loss = jnp.exp(invprobs * gamma) * loss     # 1 EUP op / element
    if alpha is not None:
        # folded: t*alpha + (1-t)*(1-alpha) == (1-alpha) + t*(2*alpha - 1)
        loss = ((1.0 - alpha) + t * (2.0 * alpha - 1.0)) * loss

    if not has_tail:
        # exact tiling: no mask anywhere
        out_ref[...] = _tile_partial_sum(loss)
    else:
        last = pl.num_programs(0) - 1

        @pl.when(i < last)
        def _():
            out_ref[...] = _tile_partial_sum(loss)

        @pl.when(i == last)
        def _():
            # mask padded flat elements only on the final block
            flat_id = (i * block_elems
                       + jax.lax.broadcasted_iota(jnp.int32, loss.shape, 0) * lane
                       + jax.lax.broadcasted_iota(jnp.int32, loss.shape, 1))
            out_ref[...] = _tile_partial_sum(
                jnp.where(flat_id < total, loss, 0.0))


def _vmem_capacity_bytes():
    try:
        info = pltpu.get_tpu_info()
        for attr in ("vmem_capacity_bytes", "vmem_bytes", "vmem_size_bytes"):
            v = getattr(info, attr, None)
            if v:
                return int(v)
    except Exception:
        pass
    return 64 << 20  # conservative (v7x-sized) fallback


def _choose_block_rows(total, lane, vmem_cap_bytes):
    """Pick block rows from physical VMEM; f32 working-set budget per block."""
    f32_budget = (4 << 20) if vmem_cap_bytes <= (64 << 20) else (8 << 20)
    tn_budget = max(16, (f32_budget // (lane * 4)) // 16 * 16)
    rows_needed = -(-total // lane)              # cdiv
    rows_needed = max(8, -(-rows_needed // 8) * 8)
    if rows_needed <= tn_budget:
        return int(rows_needed)                  # single block covers everything
    return int(tn_budget)                        # multiple of 16 (bf16-safe)


def sigmoid_focal_loss(logits, targets, gamma=2.0, alpha=None, *,
                       binary_targets=True, block_rows=None, lane=_LANE):
    """Pallas implementation of FocalLoss.forward (returns the mean loss).

    binary_targets=True enables the exact-for-{0,1}-labels transcendental
    shortcut; pass False for soft labels.
    """
    # TODO(synk): seq_mode masked-select path (p[mask], dynamic shapes) is not
    # implemented; callers should pre-select rows on the host.
    assert logits.shape == targets.shape, "focal loss is elementwise: shapes must match"
    assert lane % 128 == 0
    total = int(logits.size)
    assert total > 0

    vmem_cap = _vmem_capacity_bytes()
    tn = int(block_rows) if block_rows is not None else \
        _choose_block_rows(total, lane, vmem_cap)
    assert tn % 8 == 0, "block_rows must be a multiple of 8"

    block_elems = tn * lane
    num_blocks = int(pl.cdiv(total, block_elems))
    padded_total = num_blocks * block_elems
    has_tail = padded_total != total

    def _prep(a):
        flat = a.reshape(-1)
        if has_tail:
            flat = jnp.pad(flat, (0, padded_total - total))
        return flat.reshape(num_blocks * tn, lane)

    x2 = _prep(logits)
    t2 = _prep(targets)

    kernel = functools.partial(
        _focal_kernel,
        gamma=float(gamma),
        alpha=None if alpha is None else float(alpha),
        binary_targets=bool(binary_targets),
        total=total, block_elems=block_elems, lane=lane, has_tail=has_tail)

    cost = pl.CostEstimate(
        flops=12 * total,
        transcendentals=(3 if binary_targets else 5) * total,
        bytes_accessed=(x2.size * x2.dtype.itemsize
                        + t2.size * t2.dtype.itemsize
                        + num_blocks * 8 * lane * 4))

    vmem_limit = (48 << 20) if vmem_cap <= (64 << 20) else (96 << 20)

    partials = pl.pallas_call(
        kernel,
        out_shape=jax.ShapeDtypeStruct((num_blocks * 8, lane), jnp.float32),
        grid_spec=pltpu.PrefetchScalarGridSpec(
            num_scalar_prefetch=0,
            grid=(num_blocks,),
            in_specs=[
                pl.BlockSpec((tn, lane), lambda i: (i, 0)),   # logits block
                pl.BlockSpec((tn, lane), lambda i: (i, 0)),   # targets block
            ],
            out_specs=pl.BlockSpec((8, lane), lambda i: (i, 0)),
        ),
        compiler_params=pltpu.CompilerParams(
            dimension_semantics=("parallel",),
            vmem_limit_bytes=vmem_limit),
        cost_estimate=cost,
    )(x2, t2)

    # Tiny epilogue reduction outside the kernel (keeps the grid axis parallel).
    return jnp.sum(partials) / float(total)


def _reference(p, t, gamma=2.0, alpha=None):
    p = p.astype(jnp.float32)
    t = t.astype(jnp.float32)
    loss = p - p * t - jax.nn.log_sigmoid(p)
    invprobs = jax.nn.log_sigmoid(-p * (t * 2.0 - 1.0))
    loss = jnp.exp(invprobs * gamma) * loss
    if alpha is not None:
        loss = (t * alpha + (1.0 - t) * (1.0 - alpha)) * loss
    return jnp.mean(loss)


if __name__ == "__main__":
    key = jax.random.PRNGKey(0)
    k1, k2, k3, k4 = jax.random.split(key, 4)

    # Test 1: small single-block case (batch=8, classes=32), alpha, tail mask.
    N, C = 8, 32
    logits = jax.random.normal(k1, (N, C), dtype=jnp.float32)
    targets = (jax.random.uniform(k2, (N, C)) < 0.3).astype(jnp.float32)
    loss = jax.block_until_ready(
        sigmoid_focal_loss(logits, targets, gamma=2.0, alpha=0.25))
    ref = _reference(logits, targets, gamma=2.0, alpha=0.25)
    assert jnp.allclose(loss, ref, atol=1e-5, rtol=1e-4), (loss, ref)

    # Test 2: multi-block gridded case with a partial last block, no alpha.
    N2, C2 = 40, 32
    logits2 = jax.random.normal(k3, (N2, C2), dtype=jnp.float32)
    targets2 = (jax.random.uniform(k4, (N2, C2)) < 0.5).astype(jnp.float32)
    loss2 = jax.block_until_ready(
        sigmoid_focal_loss(logits2, targets2, gamma=2.0, alpha=None,
                           block_rows=8, lane=128))
    ref2 = _reference(logits2, targets2, gamma=2.0, alpha=None)
    assert jnp.allclose(loss2, ref2, atol=1e-5, rtol=1e-4), (loss2, ref2)

    # Test 3: general (soft-label-safe) path, same data.
    loss3 = jax.block_until_ready(
        sigmoid_focal_loss(logits2, targets2, gamma=2.0, alpha=0.25,
                           binary_targets=False, block_rows=8, lane=128))
    ref3 = _reference(logits2, targets2, gamma=2.0, alpha=0.25)
    assert jnp.allclose(loss3, ref3, atol=1e-5, rtol=1e-4), (loss3, ref3)

    # Test 4: exact tiling (no tail mask emitted) + bf16 on the wire.
    N4, C4 = 16, 128
    logits4 = jax.random.normal(k1, (N4, C4), dtype=jnp.float32)
    targets4 = (jax.random.uniform(k2, (N4, C4)) < 0.5).astype(jnp.float32)
    loss4 = jax.block_until_ready(
        sigmoid_focal_loss(logits4.astype(jnp.bfloat16),
                           targets4.astype(jnp.bfloat16),
                           gamma=2.0, alpha=0.25, block_rows=8, lane=128))
    ref4 = _reference(logits4.astype(jnp.bfloat16), targets4.astype(jnp.bfloat16),
                      gamma=2.0, alpha=0.25)
    assert jnp.allclose(loss4, ref4, atol=1e-5, rtol=1e-4), (loss4, ref4)

    print("KERNEL_OK")
</pallas_src>

<mosaic_0001>
module attributes {stable_mosaic.version = 11 : i64} {
  func.func @_focal_kernel(%arg0: i32, %arg1: memref<8x512xf32, #tpu.memory_space<vmem>>, %arg2: memref<8x512xf32, #tpu.memory_space<vmem>>, %arg3: memref<8x512xf32, #tpu.memory_space<vmem>>) attributes {dimension_semantics = [#tpu.dimension_semantics<parallel>], iteration_bounds = array<i64: 1>, scalar_prefetch = 0 : i64, scratch_operands = 0 : i64, tpu.core_type = #tpu.core_type<tc>, window_params = [{transform_indices = @transform_0, window_bounds = array<i64: 8, 512>}, {transform_indices = @transform_1, window_bounds = array<i64: 8, 512>}, {transform_indices = @transform_2, window_bounds = array<i64: 8, 512>}]} {
    %c0 = arith.constant 0 : index
    %c0_0 = arith.constant 0 : index
    %0 = vector.load %arg1[%c0, %c0_0] : memref<8x512xf32, #tpu.memory_space<vmem>>, vector<8x512xf32>
    %c0_1 = arith.constant 0 : index
    %c0_2 = arith.constant 0 : index
    %1 = vector.load %arg2[%c0_1, %c0_2] : memref<8x512xf32, #tpu.memory_space<vmem>>, vector<8x512xf32>
    %cst = arith.constant 0.000000e+00 : f32
    %2 = vector.broadcast %cst : f32 to vector<8x512xf32>
    %3 = arith.minimumf %0, %2 : vector<8x512xf32>
    %4 = math.absf %0 : vector<8x512xf32>
    %cst_3 = arith.constant 0.000000e+00 : f32
    %5 = vector.broadcast %cst_3 : f32 to vector<8x512xf32>
    %6 = arith.subf %5, %4 : vector<8x512xf32>
    %7 = math.exp %6 : vector<8x512xf32>
    %8 = math.log1p %7 : vector<8x512xf32>
    %9 = arith.subf %3, %8 : vector<8x512xf32>
    %10 = arith.mulf %0, %1 : vector<8x512xf32>
    %11 = arith.subf %0, %10 : vector<8x512xf32>
    %12 = arith.subf %11, %9 : vector<8x512xf32>
    %13 = arith.subf %9, %10 : vector<8x512xf32>
    %cst_4 = arith.constant 2.000000e+00 : f32
    %14 = vector.broadcast %cst_4 : f32 to vector<8x512xf32>
    %15 = arith.mulf %13, %14 : vector<8x512xf32>
    %16 = math.exp %15 : vector<8x512xf32>
    %17 = arith.mulf %16, %12 : vector<8x512xf32>
    %cst_5 = arith.constant -5.000000e-01 : f32
    %18 = vector.broadcast %cst_5 : f32 to vector<8x512xf32>
    %19 = arith.mulf %1, %18 : vector<8x512xf32>
    %cst_6 = arith.constant 7.500000e-01 : f32
    %20 = vector.broadcast %cst_6 : f32 to vector<8x512xf32>
    %21 = arith.addf %20, %19 : vector<8x512xf32>
    %22 = arith.mulf %21, %17 : vector<8x512xf32>
    %c0_i32 = arith.constant 0 : i32
    %23 = arith.cmpi slt, %arg0, %c0_i32 : i32
    %24 = arith.extui %23 : i1 to i32
    %c0_i32_7 = arith.constant 0 : i32
    %25 = arith.cmpi ne, %24, %c0_i32_7 : i32
    scf.if %25 {
      %29 = vector.shape_cast %22 : vector<8x512xf32> to vector<1x8x512xf32>
      %cst_10 = arith.constant dense<0.000000e+00> : vector<8x512xf32>
      %30 = vector.multi_reduction <add>, %29, %cst_10 [0] : vector<1x8x512xf32> to vector<8x512xf32>
      %c0_11 = arith.constant 0 : index
      %c0_12 = arith.constant 0 : index
      %31 = vector.load %arg3[%c0_11, %c0_12] : memref<8x512xf32, #tpu.memory_space<vmem>>, vector<8x512xf32>
      tpu.vector_store %arg3[%c0_11, %c0_12], %30 {strides = array<i32>} : memref<8x512xf32, #tpu.memory_space<vmem>>, vector<8x512xf32>,
    } else {
    }
    %c0_i32_8 = arith.constant 0 : i32
    %26 = arith.cmpi eq, %arg0, %c0_i32_8 : i32
    %27 = arith.extui %26 : i1 to i32
    %c0_i32_9 = arith.constant 0 : i32
    %28 = arith.cmpi ne, %27, %c0_i32_9 : i32
    scf.if %28 {
      %c4096_i32 = arith.constant 4096 : i32
      %29 = arith.muli %arg0, %c4096_i32 : i32
      %30 = tpu.iota {dimensions = array<i32: 0>} : vector<8x512xi32>
      %c512_i32 = arith.constant 512 : i32
      %31 = vector.broadcast %c512_i32 : i32 to vector<8x512xi32>
      %32 = arith.muli %30, %31 : vector<8x512xi32>
      %33 = vector.broadcast %29 : i32 to vector<8x512xi32>
      %34 = arith.addi %33, %32 : vector<8x512xi32>
      %35 = tpu.iota {dimensions = array<i32: 1>} : vector<8x512xi32>
      %36 = arith.addi %34, %35 : vector<8x512xi32>
      %c256_i32 = arith.constant 256 : i32
      %37 = vector.broadcast %c256_i32 : i32 to vector<8x512xi32>
      %38 = arith.cmpi slt, %36, %37 : vector<8x512xi32>
      %cst_10 = arith.constant 0.000000e+00 : f32
      %39 = vector.broadcast %cst_10 : f32 to vector<8x512xf32>
      %40 = arith.select %38, %22, %39 : vector<8x512xi1>, vector<8x512xf32>
      %41 = vector.shape_cast %40 : vector<8x512xf32> to vector<1x8x512xf32>
      %cst_11 = arith.constant dense<0.000000e+00> : vector<8x512xf32>
      %42 = vector.multi_reduction <add>, %41, %cst_11 [0] : vector<1x8x512xf32> to vector<8x512xf32>
      %c0_12 = arith.constant 0 : index
      %c0_13 = arith.constant 0 : index
      %43 = vector.load %arg3[%c0_12, %c0_13] : memref<8x512xf32, #tpu.memory_space<vmem>>, vector<8x512xf32>
      tpu.vector_store %arg3[%c0_12, %c0_13], %42 {strides = array<i32>} : memref<8x512xf32, #tpu.memory_space<vmem>>, vector<8x512xf32>,
    } else {
    }
    return
  }
  func.func @transform_0(%arg0: i32) -> (i32, i32) {
    %c0_i32 = arith.constant 0 : i32
    %c0_i32_0 = arith.constant 0 : i32
    return %arg0, %c0_i32 : i32, i32
  }
  func.func @transform_1(%arg0: i32) -> (i32, i32) {
    %c0_i32 = arith.constant 0 : i32
    %c0_i32_0 = arith.constant 0 : i32
    return %arg0, %c0_i32 : i32, i32
  }
  func.func @transform_2(%arg0: i32) -> (i32, i32) {
    %c0_i32 = arith.constant 0 : i32
    %c0_i32_0 = arith.constant 0 : i32
    return %arg0, %c0_i32 : i32, i32
  }
}

</mosaic_0001>

<llo_original>
// kernel: tpu_custom_call.1
$region0: #{tpu_custom_call.1}
  #allocation0 [shape = 'u32[]', space=smem, size = 0x4, offset = 0x4, fixed_abs, tag = 'smem constant byte address 0x4 - core index']
  #allocation1 [shape = 'u32[144,128]{1,0:T(1,128)}', space=vmem, size = 0x12000, scoped, tag = 'internal scratch']
  %s0 = inlined_call_operand.hbm [shape: f32[8,512], index: 0, kind: input, shape index: {}]
  %s1 = inlined_call_operand.hbm [shape: f32[8,512], index: 1, kind: input, shape index: {}]
  %s2 = inlined_call_operand.hbm [shape: f32[8,512], index: 2, kind: output, shape index: {}]
  %s3 = sld [smem:[#allocation0]]
  $region34: #{tpu_custom_call.1} parent=0
    _
  %s5 = ssub.s32 1, %s3
  %s6 = scalar_select 0, %s5, %s3
  $region1: #{tpu_custom_call.1} parent=0
    #allocation2 [shape = 'u8[16384]{0}', space=vmem, size = 0x4000, scoped, tag = 'input window, operand 0, single buffered']
    #allocation3 [shape = 's32[1]{0}', space=sflag, size = 0x4, scoped, tag = 'scoped memory for tpu_custom_call.1']
    #allocation4 [shape = 's32[1]{0}', space=sflag, size = 0x4, scoped, tag = 'scoped memory for tpu_custom_call.1']
    #allocation5 [shape = 'u8[16384]{0}', space=vmem, size = 0x4000, scoped, tag = 'input window, operand 1, single buffered']
    #allocation6 [shape = 's32[1]{0}', space=sflag, size = 0x4, scoped, tag = 'scoped memory for tpu_custom_call.1']
    #allocation7 [shape = 'u8[16384]{0}', space=vmem, size = 0x4000, scoped, tag = 'output window, operand 0, single buffered']
    %7 = vsyncpa [#allocation3], 0
    %8 = vsyncpa [#allocation6], 0
    %9 = vsyncpa [#allocation4], 0
    // Predicated region
    $region2: #{tpu_custom_call.1} parent=1 // pred_check
      _
    $region3: #{tpu_custom_call.1} parent=1 // pred_check_branch
      %11 = sbr.rel (0) target = $region5
    $region4: #{tpu_custom_call.1} parent=1 // pred_region
      %s13 = ssub.s32 512, 512
      %14 = vsyncadd [#allocation3], %s13
      %s16 = sshll.u32 [#allocation2], 4
      %s17 = int_to_ptr.vmem [resolvable:$true] %s16
      %19 = dma.hbm_to_vmem [thread:$0]  %s0, 512, %s17, [#allocation3]
    $region5: #{tpu_custom_call.1} parent=1 // pred_fallthru
      _
    // Predicated region
    $region6: #{tpu_custom_call.1} parent=1 // pred_check
      _
    $region7: #{tpu_custom_call.1} parent=1 // pred_check_branch
      %21 = sbr.rel (0) target = $region9
    $region8: #{tpu_custom_call.1} parent=1 // pred_region
      %s23 = ssub.s32 512, 512
      %24 = vsyncadd [#allocation6], %s23
      %s26 = sshll.u32 [#allocation5], 4
      %s27 = int_to_ptr.vmem [resolvable:$true] %s26
      %29 = dma.hbm_to_vmem [thread:$0]  %s1, 512, %s27, [#allocation6]
    $region9: #{tpu_custom_call.1} parent=1 // pred_fallthru
      _
    // Predicated region
    $region10: #{tpu_custom_call.1} parent=1 // pred_check
      _
    $region11: #{tpu_custom_call.1} parent=1 // pred_check_branch
      %31 = sbr.rel (0) target = $region13
    $region12: #{tpu_custom_call.1} parent=1 // pred_region
      %32 = dma.done [#allocation3], 512
    $region13: #{tpu_custom_call.1} parent=1 // pred_fallthru
      _
    // Predicated region
    $region14: #{tpu_custom_call.1} parent=1 // pred_check
      _
    $region15: #{tpu_custom_call.1} parent=1 // pred_check_branch
      %34 = sbr.rel (0) target = $region17
    $region16: #{tpu_custom_call.1} parent=1 // pred_region
      %35 = dma.done [#allocation6], 512
    $region17: #{tpu_custom_call.1} parent=1 // pred_fallthru
      _
    %v36 = vld [vmem:[#allocation2] sm:$0xff]
    %v37 = vld [vmem:[#allocation2 + $0x8] sm:$0xff]
    %v38 = vld [vmem:[#allocation2 + $0x10] sm:$0xff]
    %v39 = vld [vmem:[#allocation2 + $0x18] sm:$0xff]
    %v40 = vld [vmem:[#allocation5] sm:$0xff]
    %v41 = vld [vmem:[#allocation5 + $0x8] sm:$0xff]
    %v42 = vld [vmem:[#allocation5 + $0x10] sm:$0xff]
    %v43 = vld [vmem:[#allocation5 + $0x18] sm:$0xff]
    %v44 = vmin.f32 %v36, 0.0
    %v45 = vmin.f32 %v37, 0.0
    %v46 = vmin.f32 %v38, 0.0
    %v47 = vmin.f32 %v39, 0.0
    %v48 = vand.u32 2147483647, %v36
    %v49 = vand.u32 2147483647, %v37
    %v50 = vand.u32 2147483647, %v38
    %v51 = vand.u32 2147483647, %v39
    %v52 = vsub.f32 0.0, %v48
    %v53 = vsub.f32 0.0, %v49
    %v54 = vsub.f32 0.0, %v50
    %v55 = vsub.f32 0.0, %v51
    %v56 = vmul.f32 %v52, 1.442695
    %v57 = vpow.pop %v56
    %v58 = vmul.f32 %v53, 1.442695
    %v59 = vpow.pop %v58
    %v60 = vmul.f32 %v54, 1.442695
    %v61 = vpow.pop %v60
    %v62 = vmul.f32 %v55, 1.442695
    %v63 = vpow.pop %v62
    %v64 = vadd.f32 %v57, 1.0
    %v65 = vlog2.pop %v64
    %v66 = vmul.f32 %v65, 0.6931472
    %v67 = vmul.f32 -0.5, %v57
    %v68 = vadd.f32 %v67, 1.0
    %v69 = vmul.f32 %v68, %v57
    %v70 = vand.u32 2147483647, %v57
    %vm71 = vcmp.lt.f32.partialorder %v70, 0.0004427343
    %v72 = vsel %vm71, %v69, %v66
    %v73 = vadd.f32 %v59, 1.0
    %v74 = vlog2.pop %v73
    %v75 = vmul.f32 %v74, 0.6931472
    %v76 = vmul.f32 -0.5, %v59
    %v77 = vadd.f32 %v76, 1.0
    %v78 = vmul.f32 %v77, %v59
    %v79 = vand.u32 2147483647, %v59
    %vm80 = vcmp.lt.f32.partialorder %v79, 0.0004427343
    %v81 = vsel %vm80, %v78, %v75
    %v82 = vadd.f32 %v61, 1.0
    %v83 = vlog2.pop %v82
    %v84 = vmul.f32 %v83, 0.6931472
    %v85 = vmul.f32 -0.5, %v61
    %v86 = vadd.f32 %v85, 1.0
    %v87 = vmul.f32 %v86, %v61
    %v88 = vand.u32 2147483647, %v61
    %vm89 = vcmp.lt.f32.partialorder %v88, 0.0004427343
    %v90 = vsel %vm89, %v87, %v84
    %v91 = vadd.f32 %v63, 1.0
    %v92 = vlog2.pop %v91
    %v93 = vmul.f32 %v92, 0.6931472
    %v94 = vmul.f32 -0.5, %v63
    %v95 = vadd.f32 %v94, 1.0
    %v96 = vmul.f32 %v95, %v63
    %v97 = vand.u32 2147483647, %v63
    %vm98 = vcmp.lt.f32.partialorder %v97, 0.0004427343
    %v99 = vsel %vm98, %v96, %v93
    %v100 = vsub.f32 %v44, %v72
    %v101 = vsub.f32 %v45, %v81
    %v102 = vsub.f32 %v46, %v90
    %v103 = vsub.f32 %v47, %v99
    %v104 = vmul.f32 %v36, %v40
    %v105 = vmul.f32 %v37, %v41
    %v106 = vmul.f32 %v38, %v42
    %v107 = vmul.f32 %v39, %v43
    %v108 = vsub.f32 %v36, %v104
    %v109 = vsub.f32 %v37, %v105
    %v110 = vsub.f32 %v38, %v106
    %v111 = vsub.f32 %v39, %v107
    %v112 = vsub.f32 %v108, %v100
    %v113 = vsub.f32 %v109, %v101
    %v114 = vsub.f32 %v110, %v102
    %v115 = vsub.f32 %v111, %v103
    %v116 = vsub.f32 %v100, %v104
    %v117 = vsub.f32 %v101, %v105
    %v118 = vsub.f32 %v102, %v106
    %v119 = vsub.f32 %v103, %v107
    %v120 = vmul.f32 %v116, 2.0
    %v121 = vmul.f32 %v117, 2.0
    %v122 = vmul.f32 %v118, 2.0
    %v123 = vmul.f32 %v119, 2.0
    %v124 = vmul.f32 %v120, 1.442695
    %v125 = vpow.pop %v124
    %v126 = vmul.f32 %v121, 1.442695
    %v127 = vpow.pop %v126
    %v128 = vmul.f32 %v122, 1.442695
    %v129 = vpow.pop %v128
    %v130 = vmul.f32 %v123, 1.442695
    %v131 = vpow.pop %v130
    %v132 = vmul.f32 %v125, %v112
    %v133 = vmul.f32 %v127, %v113
    %v134 = vmul.f32 %v129, %v114
    %v135 = vmul.f32 %v131, %v115
    %v136 = vmul.f32 %v40, -0.5
    %v137 = vmul.f32 %v41, -0.5
    %v138 = vmul.f32 %v42, -0.5
    %v139 = vmul.f32 %v43, -0.5
    %v140 = vadd.f32 %v136, 0.75
    %v141 = vadd.f32 %v137, 0.75
    %v142 = vadd.f32 %v138, 0.75
    %v143 = vadd.f32 %v139, 0.75
    %v144 = vmul.f32 %v140, %v132
    %v145 = vmul.f32 %v141, %v133
    %v146 = vmul.f32 %v142, %v134
    %v147 = vmul.f32 %v143, %v135
    %p148 = scmp.lt.s32.totalorder 0, 0
    // Predicated region
    $region18: #{tpu_custom_call.1} parent=1 // pred_check
      %p149 = pneg %p148
    $region19: #{tpu_custom_call.1} parent=1 // pred_check_branch
      %151 = sbr.rel (%p149) target = $region21
    $region20: #{tpu_custom_call.1} parent=1 // pred_region
      %v152 = vadd.f32 %v144, 0.0
      %v153 = vadd.f32 %v145, 0.0
      %v154 = vadd.f32 %v146, 0.0
      %v155 = vadd.f32 %v147, 0.0
      %156 = vst [vmem:[#allocation7] sm:$0xff] %v152
      %157 = vst [vmem:[#allocation7 + $0x8] sm:$0xff] %v153
      %158 = vst [vmem:[#allocation7 + $0x10] sm:$0xff] %v154
      %159 = vst [vmem:[#allocation7 + $0x18] sm:$0xff] %v155
    $region21: #{tpu_custom_call.1} parent=1 // pred_fallthru
      _
    %p160 = scmp.eq.s32.totalorder 0, 0
    // Predicated region
    $region22: #{tpu_custom_call.1} parent=1 // pred_check
      %p161 = pneg %p160
    $region23: #{tpu_custom_call.1} parent=1 // pred_check_branch
      %163 = sbr.rel (%p161) target = $region25
    $region24: #{tpu_custom_call.1} parent=1 // pred_region
      %s164 = smul.u32 0, 4096
      %v165 = vlaneseq
      %v166 = vshrl.u32 %v165, 7
      %v167 = vmul.u32 %v166, 512
      %v168 = vstv %s164
      %v169 = vadd.s32 %v168, %v167
      %v170 = vlaneseq
      %v171 = vand.u32 %v170, 127
      %v172 = vadd.s32 %v171, 128
      %v173 = vadd.s32 %v171, 256
      %v174 = vadd.s32 %v171, 384
      %v175 = vadd.s32 %v169, %v171
      %v176 = vadd.s32 %v169, %v172
      %v177 = vadd.s32 %v169, %v173
      %v178 = vadd.s32 %v169, %v174
      %vm179 = vcmp.lt.s32.totalorder %v175, 256
      %vm180 = vcmp.lt.s32.totalorder %v176, 256
      %vm181 = vcmp.lt.s32.totalorder %v177, 256
      %vm182 = vcmp.lt.s32.totalorder %v178, 256
      %v183 = vsel %vm179, %v144, 0.0
      %v184 = vsel %vm180, %v145, 0.0
      %v185 = vsel %vm181, %v146, 0.0
      %v186 = vsel %vm182, %v147, 0.0
      %v187 = vadd.f32 %v183, 0.0
      %v188 = vadd.f32 %v184, 0.0
      %v189 = vadd.f32 %v185, 0.0
      %v190 = vadd.f32 %v186, 0.0
      %191 = vst [vmem:[#allocation7] sm:$0xff] %v187
      %192 = vst [vmem:[#allocation7 + $0x8] sm:$0xff] %v188
      %193 = vst [vmem:[#allocation7 + $0x10] sm:$0xff] %v189
      %194 = vst [vmem:[#allocation7 + $0x18] sm:$0xff] %v190
    $region25: #{tpu_custom_call.1} parent=1 // pred_fallthru
      _
    // Predicated region
    $region26: #{tpu_custom_call.1} parent=1 // pred_check
      _
    $region27: #{tpu_custom_call.1} parent=1 // pred_check_branch
      %196 = sbr.rel (0) target = $region29
    $region28: #{tpu_custom_call.1} parent=1 // pred_region
      %s198 = ssub.s32 512, 512
      %199 = vsyncadd [#allocation4], %s198
      %s201 = sshll.u32 [#allocation7], 4
      %s202 = int_to_ptr.vmem [resolvable:$true] %s201
      %204 = dma.vmem_to_hbm [thread:$0]  %s202, 512, %s2, [#allocation4]
    $region29: #{tpu_custom_call.1} parent=1 // pred_fallthru
      _
    // Predicated region
    $region30: #{tpu_custom_call.1} parent=1 // pred_check
      _
    $region31: #{tpu_custom_call.1} parent=1 // pred_check_branch
      %206 = sbr.rel (0) target = $region33
    $region32: #{tpu_custom_call.1} parent=1 // pred_region
      %207 = dma.done [#allocation4], 512
    $region33: #{tpu_custom_call.1} parent=1 // pred_fallthru
      _
    %208 = vsyncpa [#allocation3], 1
    %209 = vsyncpa [#allocation6], 1
    %210 = vsyncpa [#allocation4], 1

</llo_original>
